<compile_context>
chip_gen: v7x
topology: tpu7x:2x2x1
jax: 0.10.0
libtpu: 0.0.40
codegen_flags: <defaults>
</compile_context>

<pallas_src>
import functools

import jax
import jax.numpy as jnp
from jax import lax
from jax.experimental import pallas as pl
from jax.experimental.pallas import tpu as pltpu


def ff_layer_kernel(xa_ref, xb_ref, wa_ref, wb_ref, b1_ref, w2_ref, b2_ref,
                    o_ref, y_scr, *, d_out, repack, num_rows, ragged):
    """One row-tile: two input-map matmuls, relu, linear2, residual, layernorm.

    xa_ref : (TM, d_out)  first input node (also the residual source), bf16/f32
    xb_ref : (TM, db)     second input node
    wa_ref : (d_out, ff), wb_ref: (db, ff), b1_ref: (1, ff)  (fused ba+bb)
    w2_ref : (ff, d_out), b2_ref: (1, d_out)
    o_ref  : (TM//repack, repack*d_out)   lane-dense packed output
    y_scr  : (TM, d_out) f32 VMEM scratch used for the lane-dense repack
    """
    xa = xa_ref[...].astype(jnp.float32)                      # (TM, d_out)
    xb = xb_ref[...].astype(jnp.float32)                      # (TM, db)
    tm_blk = xa.shape[0]

    if ragged:
        # Zero out rows past the true row count (last partial tile) so any
        # stale VMEM garbage can never propagate (robust against NaN/Inf).
        rid = (pl.program_id(0) * tm_blk
               + lax.broadcasted_iota(jnp.int32, (tm_blk, 1), 0))
        valid = rid < num_rows
        xa = jnp.where(valid, xa, 0.0)
        xb = jnp.where(valid, xb, 0.0)

    # sum of the two input maps, relu  (f32 MXU accumulation)
    h = (jnp.dot(xa, wa_ref[...], preferred_element_type=jnp.float32)
         + jnp.dot(xb, wb_ref[...], preferred_element_type=jnp.float32)
         + b1_ref[...])
    h = jnp.maximum(h, 0.0)

    # linear2: ff_dim -> out_dim, plus residual from the first input node
    y = jnp.dot(h, w2_ref[...], preferred_element_type=jnp.float32) + b2_ref[...]
    y = y + xa

    # LayerNorm(out_dim, elementwise_affine=False), eps = 1e-5 (f32 stats)
    mean = jnp.mean(y, axis=-1, keepdims=True)
    var = jnp.mean((y - mean) * (y - mean), axis=-1, keepdims=True)
    y = (y - mean) * lax.rsqrt(var + 1e-5)

    if repack == 1:
        o_ref[...] = y.astype(o_ref.dtype)
    else:
        # Lane-dense repack: packed row p, lane block k  <-  original row
        # repack*p + k.  Done with sublane-strided reads from a VMEM scratch
        # so the final HBM writeback DMA is fully 128-lane dense.
        y_scr[...] = y
        rows = tm_blk // repack
        for k in range(repack):
            part = y_scr[pl.ds(k, rows, stride=repack), :]
            o_ref[:, k * d_out:(k + 1) * d_out] = part.astype(o_ref.dtype)


def _round_up(x, m):
    return ((x + m - 1) // m) * m


def ff_layer_forward(xa, xb, wa, ba, wb, bb, w2, b2, *, tm=1024):
    """xa: (B, S, d_out) first input node (residual source); xb: (B, S, db).

    Weights follow nn.Linear's math transposed to (in_dim, out_dim) so the
    kernel does x @ W + b on the MXU.  Activation dtype (e.g. bf16) is kept
    at the HBM boundary; compute is f32 inside the kernel.
    """
    B, S, d_out = xa.shape
    db = xb.shape[-1]
    ff = wa.shape[-1]
    M = B * S

    xa2 = xa.reshape(M, d_out)            # leading-dim collapse: no copy
    xb2 = xb.reshape(M, db)

    # Tiny parameter prep (one-time, negligible): fuse the two input-map
    # biases and pin all params to f32 for exact f32 in-kernel math.
    wa = wa.astype(jnp.float32)
    wb = wb.astype(jnp.float32)
    w2 = w2.astype(jnp.float32)
    b1 = (ba.astype(jnp.float32) + bb.astype(jnp.float32))     # (1, ff)
    b2 = b2.astype(jnp.float32)

    # ---- lane-dense output packing factor --------------------------------
    if d_out < 128 and 128 % d_out == 0 and M % (128 // d_out) == 0:
        r = 128 // d_out
    else:
        r = 1                                                 # plain layout

    # ---- row tiling --------------------------------------------------------
    row_align = 8 * r
    if M <= tm:
        tm_blk = M                       # single tile: block == full array
        n_tiles = 1
    else:
        tm_blk = _round_up(min(tm, M), row_align)
        n_tiles = pl.cdiv(M, tm_blk)
        if n_tiles % 2 == 1:             # v7x: even tile count keeps both TCs busy
            tm_blk = _round_up(pl.cdiv(M, n_tiles + 1), row_align)
            n_tiles = pl.cdiv(M, tm_blk)
    ragged = (n_tiles * tm_blk != M)

    rows_out = M // r
    cols_out = r * d_out
    out_blk_rows = tm_blk // r

    # advisory cost estimate (reflects actual kernel HBM traffic, bf16 acts)
    flops = 2 * M * ff * (d_out + db) + 2 * M * ff * d_out + 10 * M * d_out
    act_bytes = xa2.dtype.itemsize * M * (d_out + db)
    out_bytes = xa2.dtype.itemsize * M * d_out
    w_bytes = 4 * (d_out * ff + db * ff + ff + ff * d_out + d_out)

    kernel = functools.partial(
        ff_layer_kernel, d_out=d_out, repack=r, num_rows=M, ragged=ragged)

    out = pl.pallas_call(
        kernel,
        out_shape=jax.ShapeDtypeStruct((rows_out, cols_out), xa.dtype),
        grid=(n_tiles,),
        in_specs=[
            pl.BlockSpec((tm_blk, d_out), lambda i: (i, 0)),   # xa tile
            pl.BlockSpec((tm_blk, db),    lambda i: (i, 0)),   # xb tile
            pl.BlockSpec((d_out, ff),     lambda i: (0, 0)),   # resident weights
            pl.BlockSpec((db, ff),        lambda i: (0, 0)),
            pl.BlockSpec((1, ff),         lambda i: (0, 0)),
            pl.BlockSpec((ff, d_out),     lambda i: (0, 0)),
            pl.BlockSpec((1, d_out),      lambda i: (0, 0)),
        ],
        out_specs=pl.BlockSpec((out_blk_rows, cols_out), lambda i: (i, 0)),
        scratch_shapes=[pltpu.VMEM((tm_blk, d_out), jnp.float32)],
        compiler_params=pltpu.CompilerParams(
            dimension_semantics=("parallel",),
            vmem_limit_bytes=64 * 1024 * 1024),
        cost_estimate=pl.CostEstimate(
            flops=flops, transcendentals=M,
            bytes_accessed=act_bytes + out_bytes + w_bytes),
    )(xa2, xb2, wa, wb, b1, w2, b2)

    # (M//r, r*d_out) is byte-identical to (M, d_out) row-major: free reshape.
    return out.reshape(B, S, d_out)


def _reference(xa, xb, wa, ba, wb, bb, w2, b2):
    """Pure-JAX mirror of the PyTorch forward (two separate input maps)."""
    hp = jax.lax.Precision.HIGHEST
    h = (jnp.dot(xa, wa, precision=hp) + ba[0]
         + jnp.dot(xb, wb, precision=hp) + bb[0])
    h = jnp.maximum(h, 0.0)
    y = jnp.dot(h, w2, precision=hp) + b2[0] + xa
    mean = jnp.mean(y, axis=-1, keepdims=True)
    var = jnp.mean((y - mean) ** 2, axis=-1, keepdims=True)
    return (y - mean) / jnp.sqrt(var + 1e-5)


if __name__ == "__main__":
    # Small synthetic shapes consistent with the module:
    #   two connected input nodes: "a" (out_dim -> residual source) and "b".
    batch, seq = 2, 8
    out_dim = 32        # FFLayer out_dim (also dim of first input node "a")
    ff_dim = 64         # FFLayer ff_dim
    db = 16             # dim of second input node "b"

    key = jax.random.PRNGKey(0)
    ks = jax.random.split(key, 8)

    # Parameters stored transposed to (in_dim, out_dim) nn.Linear convention.
    wa = jax.random.normal(ks[0], (out_dim, ff_dim), jnp.float32) * 0.1
    ba = jax.random.normal(ks[1], (1, ff_dim), jnp.float32) * 0.1
    wb = jax.random.normal(ks[2], (db, ff_dim), jnp.float32) * 0.1
    bb = jax.random.normal(ks[3], (1, ff_dim), jnp.float32) * 0.1
    w2 = jax.random.normal(ks[4], (ff_dim, out_dim), jnp.float32) * 0.1
    b2 = jax.random.normal(ks[5], (1, out_dim), jnp.float32) * 0.1

    # Inputs X = {"a": xa, "b": xb}; activations live in bf16 at the HBM
    # boundary (kernel computes in f32 internally).
    xa = jax.random.normal(ks[6], (batch, seq, out_dim), jnp.float32).astype(
        jnp.bfloat16)
    xb = jax.random.normal(ks[7], (batch, seq, db), jnp.float32).astype(
        jnp.bfloat16)

    y = ff_layer_forward(xa, xb, wa, ba, wb, bb, w2, b2)
    jax.block_until_ready(y)

    # correctness check against a pure-JAX f32 reference computed on the same
    # bf16-quantized inputs (kernel output itself is bf16 -> loose tolerance)
    xa32 = xa.astype(jnp.float32).reshape(-1, out_dim)
    xb32 = xb.astype(jnp.float32).reshape(-1, db)
    y_ref = _reference(xa32, xb32, wa, ba, wb, bb, w2, b2).reshape(
        batch, seq, out_dim)
    err = float(jnp.max(jnp.abs(y.astype(jnp.float32) - y_ref)))
    assert err < 3e-2, err

    print("KERNEL_OK")
</pallas_src>

<mosaic_0001>
module attributes {stable_mosaic.version = 11 : i64} {
  func.func @ff_layer_kernel(%arg0: i32, %arg1: memref<16x32xbf16, #tpu.memory_space<vmem>>, %arg2: memref<16x16xbf16, #tpu.memory_space<vmem>>, %arg3: memref<32x64xf32, #tpu.memory_space<vmem>>, %arg4: memref<16x64xf32, #tpu.memory_space<vmem>>, %arg5: memref<1x64xf32, #tpu.memory_space<vmem>>, %arg6: memref<64x32xf32, #tpu.memory_space<vmem>>, %arg7: memref<1x32xf32, #tpu.memory_space<vmem>>, %arg8: memref<4x128xbf16, #tpu.memory_space<vmem>>, %arg9: memref<16x32xf32, #tpu.memory_space<vmem>>) attributes {dimension_semantics = [#tpu.dimension_semantics<parallel>], iteration_bounds = array<i64: 1>, scalar_prefetch = 0 : i64, scratch_operands = 1 : i64, tpu.core_type = #tpu.core_type<tc>, window_params = [{transform_indices = @transform_0, window_bounds = array<i64: 16, 32>}, {transform_indices = @transform_1, window_bounds = array<i64: 16, 16>}, {pipeline_mode = #tpu.pipeline_mode<synchronous>, transform_indices = @transform_2, window_bounds = array<i64: 32, 64>}, {pipeline_mode = #tpu.pipeline_mode<synchronous>, transform_indices = @transform_3, window_bounds = array<i64: 16, 64>}, {pipeline_mode = #tpu.pipeline_mode<synchronous>, transform_indices = @transform_4, window_bounds = array<i64: 1, 64>}, {pipeline_mode = #tpu.pipeline_mode<synchronous>, transform_indices = @transform_5, window_bounds = array<i64: 64, 32>}, {pipeline_mode = #tpu.pipeline_mode<synchronous>, transform_indices = @transform_6, window_bounds = array<i64: 1, 32>}, {transform_indices = @transform_7, window_bounds = array<i64: 4, 128>}]} {
    %c0 = arith.constant 0 : index
    %c0_0 = arith.constant 0 : index
    %0 = vector.load %arg1[%c0, %c0_0] : memref<16x32xbf16, #tpu.memory_space<vmem>>, vector<16x32xbf16>
    %1 = arith.extf %0 : vector<16x32xbf16> to vector<16x32xf32>
    %c0_1 = arith.constant 0 : index
    %c0_2 = arith.constant 0 : index
    %2 = vector.load %arg2[%c0_1, %c0_2] : memref<16x16xbf16, #tpu.memory_space<vmem>>, vector<16x16xbf16>
    %3 = arith.extf %2 : vector<16x16xbf16> to vector<16x16xf32>
    %c0_3 = arith.constant 0 : index
    %c0_4 = arith.constant 0 : index
    %4 = vector.load %arg3[%c0_3, %c0_4] : memref<32x64xf32, #tpu.memory_space<vmem>>, vector<32x64xf32>
    %cst = arith.constant dense<0.000000e+00> : vector<16x64xf32>
    %5 = tpu.matmul %1, %4, %cst {dimension_numbers = #tpu.dot_dimension_numbers<[1], [0], [0], [1], [0, 0, 1, 1], [], []>} : vector<16x32xf32>, vector<32x64xf32>, vector<16x64xf32> -> vector<16x64xf32>
    %c0_5 = arith.constant 0 : index
    %c0_6 = arith.constant 0 : index
    %6 = vector.load %arg4[%c0_5, %c0_6] : memref<16x64xf32, #tpu.memory_space<vmem>>, vector<16x64xf32>
    %cst_7 = arith.constant dense<0.000000e+00> : vector<16x64xf32>
    %7 = tpu.matmul %3, %6, %cst_7 {dimension_numbers = #tpu.dot_dimension_numbers<[1], [0], [0], [1], [0, 0, 1, 1], [], []>} : vector<16x16xf32>, vector<16x64xf32>, vector<16x64xf32> -> vector<16x64xf32>
    %8 = arith.addf %5, %7 : vector<16x64xf32>
    %c0_8 = arith.constant 0 : index
    %c0_9 = arith.constant 0 : index
    %9 = vector.load %arg5[%c0_8, %c0_9] : memref<1x64xf32, #tpu.memory_space<vmem>>, vector<1x64xf32>
    %10 = vector.broadcast %9 : vector<1x64xf32> to vector<16x64xf32>
    %11 = arith.addf %8, %10 : vector<16x64xf32>
    %cst_10 = arith.constant 0.000000e+00 : f32
    %12 = vector.broadcast %cst_10 : f32 to vector<16x64xf32>
    %13 = arith.maximumf %11, %12 : vector<16x64xf32>
    %c0_11 = arith.constant 0 : index
    %c0_12 = arith.constant 0 : index
    %14 = vector.load %arg6[%c0_11, %c0_12] : memref<64x32xf32, #tpu.memory_space<vmem>>, vector<64x32xf32>
    %cst_13 = arith.constant dense<0.000000e+00> : vector<16x32xf32>
    %15 = tpu.matmul %13, %14, %cst_13 {dimension_numbers = #tpu.dot_dimension_numbers<[1], [0], [0], [1], [0, 0, 1, 1], [], []>} : vector<16x64xf32>, vector<64x32xf32>, vector<16x32xf32> -> vector<16x32xf32>
    %c0_14 = arith.constant 0 : index
    %c0_15 = arith.constant 0 : index
    %16 = vector.load %arg7[%c0_14, %c0_15] : memref<1x32xf32, #tpu.memory_space<vmem>>, vector<1x32xf32>
    %17 = vector.broadcast %16 : vector<1x32xf32> to vector<16x32xf32>
    %18 = arith.addf %15, %17 : vector<16x32xf32>
    %19 = arith.addf %18, %1 : vector<16x32xf32>
    %cst_16 = arith.constant dense<0.000000e+00> : vector<16xf32>
    %20 = vector.multi_reduction <add>, %19, %cst_16 [1] : vector<16x32xf32> to vector<16xf32>
    %21 = vector.shape_cast %20 : vector<16xf32> to vector<16x1xf32>
    %cst_17 = arith.constant 3.200000e+01 : f32
    %22 = vector.broadcast %cst_17 : f32 to vector<16x1xf32>
    %23 = arith.divf %21, %22 : vector<16x1xf32>
    %24 = vector.broadcast %23 : vector<16x1xf32> to vector<16x32xf32>
    %25 = arith.subf %19, %24 : vector<16x32xf32>
    %26 = vector.broadcast %23 : vector<16x1xf32> to vector<16x32xf32>
    %27 = arith.subf %19, %26 : vector<16x32xf32>
    %28 = arith.mulf %25, %27 : vector<16x32xf32>
    %cst_18 = arith.constant dense<0.000000e+00> : vector<16xf32>
    %29 = vector.multi_reduction <add>, %28, %cst_18 [1] : vector<16x32xf32> to vector<16xf32>
    %30 = vector.shape_cast %29 : vector<16xf32> to vector<16x1xf32>
    %cst_19 = arith.constant 3.200000e+01 : f32
    %31 = vector.broadcast %cst_19 : f32 to vector<16x1xf32>
    %32 = arith.divf %30, %31 : vector<16x1xf32>
    %33 = vector.broadcast %23 : vector<16x1xf32> to vector<16x32xf32>
    %34 = arith.subf %19, %33 : vector<16x32xf32>
    %cst_20 = arith.constant 9.99999974E-6 : f32
    %35 = vector.broadcast %cst_20 : f32 to vector<16x1xf32>
    %36 = arith.addf %32, %35 : vector<16x1xf32>
    %37 = math.rsqrt %36 : vector<16x1xf32>
    %38 = vector.broadcast %37 : vector<16x1xf32> to vector<16x32xf32>
    %39 = arith.mulf %34, %38 : vector<16x32xf32>
    %c0_21 = arith.constant 0 : index
    %c0_22 = arith.constant 0 : index
    %40 = vector.load %arg9[%c0_21, %c0_22] : memref<16x32xf32, #tpu.memory_space<vmem>>, vector<16x32xf32>
    tpu.vector_store %arg9[%c0_21, %c0_22], %39 {strides = array<i32>} : memref<16x32xf32, #tpu.memory_space<vmem>>, vector<16x32xf32>,
    %c0_23 = arith.constant 0 : index
    %c0_24 = arith.constant 0 : index
    %41 = tpu.strided_load %arg9[%c0_23, %c0_24] {strides = array<i32: 4, 1>} : memref<16x32xf32, #tpu.memory_space<vmem>>, vector<4x32xf32>
    %42 = arith.truncf %41 : vector<4x32xf32> to vector<4x32xbf16>
    %c0_25 = arith.constant 0 : index
    %c0_26 = arith.constant 0 : index
    %43 = vector.load %arg8[%c0_25, %c0_26] : memref<4x128xbf16, #tpu.memory_space<vmem>>, vector<4x32xbf16>
    tpu.vector_store %arg8[%c0_25, %c0_26], %42 {strides = array<i32>} : memref<4x128xbf16, #tpu.memory_space<vmem>>, vector<4x32xbf16>,
    %c1 = arith.constant 1 : index
    %c0_27 = arith.constant 0 : index
    %44 = tpu.strided_load %arg9[%c1, %c0_27] {strides = array<i32: 4, 1>} : memref<16x32xf32, #tpu.memory_space<vmem>>, vector<4x32xf32>
    %45 = arith.truncf %44 : vector<4x32xf32> to vector<4x32xbf16>
    %c0_28 = arith.constant 0 : index
    %c32 = arith.constant 32 : index
    %46 = vector.load %arg8[%c0_28, %c32] : memref<4x128xbf16, #tpu.memory_space<vmem>>, vector<4x32xbf16>
    tpu.vector_store %arg8[%c0_28, %c32], %45 {strides = array<i32>} : memref<4x128xbf16, #tpu.memory_space<vmem>>, vector<4x32xbf16>,
    %c2 = arith.constant 2 : index
    %c0_29 = arith.constant 0 : index
    %47 = tpu.strided_load %arg9[%c2, %c0_29] {strides = array<i32: 4, 1>} : memref<16x32xf32, #tpu.memory_space<vmem>>, vector<4x32xf32>
    %48 = arith.truncf %47 : vector<4x32xf32> to vector<4x32xbf16>
    %c0_30 = arith.constant 0 : index
    %c64 = arith.constant 64 : index
    %49 = vector.load %arg8[%c0_30, %c64] : memref<4x128xbf16, #tpu.memory_space<vmem>>, vector<4x32xbf16>
    tpu.vector_store %arg8[%c0_30, %c64], %48 {strides = array<i32>} : memref<4x128xbf16, #tpu.memory_space<vmem>>, vector<4x32xbf16>,
    %c3 = arith.constant 3 : index
    %c0_31 = arith.constant 0 : index
    %50 = tpu.strided_load %arg9[%c3, %c0_31] {strides = array<i32: 4, 1>} : memref<16x32xf32, #tpu.memory_space<vmem>>, vector<4x32xf32>
    %51 = arith.truncf %50 : vector<4x32xf32> to vector<4x32xbf16>
    %c0_32 = arith.constant 0 : index
    %c96 = arith.constant 96 : index
    %52 = vector.load %arg8[%c0_32, %c96] : memref<4x128xbf16, #tpu.memory_space<vmem>>, vector<4x32xbf16>
    tpu.vector_store %arg8[%c0_32, %c96], %51 {strides = array<i32>} : memref<4x128xbf16, #tpu.memory_space<vmem>>, vector<4x32xbf16>,
    return
  }
  func.func @transform_0(%arg0: i32) -> (i32, i32) {
    %c0_i32 = arith.constant 0 : i32
    %c0_i32_0 = arith.constant 0 : i32
    return %arg0, %c0_i32 : i32, i32
  }
  func.func @transform_1(%arg0: i32) -> (i32, i32) {
    %c0_i32 = arith.constant 0 : i32
    %c0_i32_0 = arith.constant 0 : i32
    return %arg0, %c0_i32 : i32, i32
  }
  func.func @transform_2(%arg0: i32) -> (i32, i32) {
    %c0_i32 = arith.constant 0 : i32
    %c0_i32_0 = arith.constant 0 : i32
    %c0_i32_1 = arith.constant 0 : i32
    return %c0_i32, %c0_i32_0 : i32, i32
  }
  func.func @transform_3(%arg0: i32) -> (i32, i32) {
    %c0_i32 = arith.constant 0 : i32
    %c0_i32_0 = arith.constant 0 : i32
    %c0_i32_1 = arith.constant 0 : i32
    return %c0_i32, %c0_i32_0 : i32, i32
  }
  func.func @transform_4(%arg0: i32) -> (i32, i32) {
    %c0_i32 = arith.constant 0 : i32
    %c0_i32_0 = arith.constant 0 : i32
    %c0_i32_1 = arith.constant 0 : i32
    return %c0_i32, %c0_i32_0 : i32, i32
  }
  func.func @transform_5(%arg0: i32) -> (i32, i32) {
    %c0_i32 = arith.constant 0 : i32
    %c0_i32_0 = arith.constant 0 : i32
    %c0_i32_1 = arith.constant 0 : i32
    return %c0_i32, %c0_i32_0 : i32, i32
  }
  func.func @transform_6(%arg0: i32) -> (i32, i32) {
    %c0_i32 = arith.constant 0 : i32
    %c0_i32_0 = arith.constant 0 : i32
    %c0_i32_1 = arith.constant 0 : i32
    return %c0_i32, %c0_i32_0 : i32, i32
  }
  func.func @transform_7(%arg0: i32) -> (i32, i32) {
    %c0_i32 = arith.constant 0 : i32
    %c0_i32_0 = arith.constant 0 : i32
    return %arg0, %c0_i32 : i32, i32
  }
}

</mosaic_0001>

<llo_original>
// kernel: tpu_custom_call.1
$region0: #{tpu_custom_call.1}
  #allocation0 [shape = 'u32[]', space=smem, size = 0x4, offset = 0x4, fixed_abs, tag = 'smem constant byte address 0x4 - core index']
  #allocation1 [shape = 'u32[144,128]{1,0:T(1,128)}', space=vmem, size = 0x12000, scoped, tag = 'internal scratch']
  #allocation2 [shape = 'f32[16,32]{1,0:T(8,128)}', space=vmem, size = 0x2000, scoped, tag = 'scratch operand']
  %s0 = inlined_call_operand.hbm [shape: bf16[16,32], index: 0, kind: input, shape index: {}]
  %s1 = inlined_call_operand.hbm [shape: bf16[16,16], index: 1, kind: input, shape index: {}]
  %s2 = inlined_call_operand.hbm [shape: f32[32,64], index: 2, kind: input, shape index: {}]
  %s3 = inlined_call_operand.hbm [shape: f32[16,64], index: 3, kind: input, shape index: {}]
  %s4 = inlined_call_operand.hbm [shape: f32[1,64], index: 4, kind: input, shape index: {}]
  %s5 = inlined_call_operand.hbm [shape: f32[64,32], index: 5, kind: input, shape index: {}]
  %s6 = inlined_call_operand.hbm [shape: f32[1,32], index: 6, kind: input, shape index: {}]
  %s7 = inlined_call_operand.hbm [shape: bf16[4,128], index: 7, kind: output, shape index: {}]
  %s8 = sld [smem:[#allocation0]]
  $region66: #{tpu_custom_call.1} parent=0
    _
  %s10 = ssub.s32 1, %s8
  %s11 = scalar_select 0, %s10, %s8
  $region1: #{tpu_custom_call.1} parent=0
    #allocation3 [shape = 'u8[4096]{0}', space=vmem, size = 0x1000, scoped, tag = 'input window, operand 0, single buffered']
    #allocation4 [shape = 's32[1]{0}', space=sflag, size = 0x4, scoped, tag = 'scoped memory for tpu_custom_call.1']
    #allocation5 [shape = 's32[1]{0}', space=sflag, size = 0x4, scoped, tag = 'scoped memory for tpu_custom_call.1']
    #allocation6 [shape = 'u8[4096]{0}', space=vmem, size = 0x1000, scoped, tag = 'input window, operand 1, single buffered']
    #allocation7 [shape = 's32[1]{0}', space=sflag, size = 0x4, scoped, tag = 'scoped memory for tpu_custom_call.1']
    #allocation8 [shape = 'u8[16384]{0}', space=vmem, size = 0x4000, scoped, tag = 'input window, operand 2, single buffered']
    #allocation9 [shape = 'u8[8192]{0}', space=vmem, size = 0x2000, scoped, tag = 'input window, operand 3, single buffered']
    #allocation10 [shape = 's32[1]{0}', space=sflag, size = 0x4, scoped, tag = 'scoped memory for tpu_custom_call.1']
    #allocation11 [shape = 'u8[512]{0}', space=vmem, size = 0x400, scoped, tag = 'input window, operand 4, single buffered']
    #allocation12 [shape = 'u8[32768]{0}', space=vmem, size = 0x8000, scoped, tag = 'input window, operand 5, single buffered']
    #allocation13 [shape = 's32[1]{0}', space=sflag, size = 0x4, scoped, tag = 'scoped memory for tpu_custom_call.1']
    #allocation14 [shape = 'u8[512]{0}', space=vmem, size = 0x400, scoped, tag = 'input window, operand 6, single buffered']
    #allocation15 [shape = 'u8[1024]{0}', space=vmem, size = 0x400, scoped, tag = 'output window, operand 0, single buffered']
    %12 = vsyncpa [#allocation4], 0
    %13 = vsyncpa [#allocation7], 0
    %14 = vsyncpa [#allocation10], 0
    %15 = vsyncpa [#allocation13], 0
    %16 = vsyncpa [#allocation5], 0
    // Predicated region
    $region2: #{tpu_custom_call.1} parent=1 // pred_check
      _
    $region3: #{tpu_custom_call.1} parent=1 // pred_check_branch
      %18 = sbr.rel (0) target = $region5
    $region4: #{tpu_custom_call.1} parent=1 // pred_region
      %s20 = ssub.s32 128, 128
      %21 = vsyncadd [#allocation4], %s20
      %s22 = sshll.u32 [#allocation3], 4
      %s23 = int_to_ptr.vmem [resolvable:$true] %s22
      %28 = dma.hbm_to_vmem [thread:$0]  %s0, 128, %s23, [#allocation4], 64, 64, 4
    $region5: #{tpu_custom_call.1} parent=1 // pred_fallthru
      _
    // Predicated region
    $region6: #{tpu_custom_call.1} parent=1 // pred_check
      _
    $region7: #{tpu_custom_call.1} parent=1 // pred_check_branch
      %30 = sbr.rel (0) target = $region9
    $region8: #{tpu_custom_call.1} parent=1 // pred_region
      %s32 = ssub.s32 128, 128
      %33 = vsyncadd [#allocation7], %s32
      %s34 = sshll.u32 [#allocation6], 4
      %s35 = int_to_ptr.vmem [resolvable:$true] %s34
      %40 = dma.hbm_to_vmem [thread:$0]  %s1, 128, %s35, [#allocation7], 64, 64, 4
    $region9: #{tpu_custom_call.1} parent=1 // pred_fallthru
      _
    // Predicated region
    $region10: #{tpu_custom_call.1} parent=1 // pred_check
      _
    $region11: #{tpu_custom_call.1} parent=1 // pred_check_branch
      %42 = sbr.rel (0) target = $region13
    $region12: #{tpu_custom_call.1} parent=1 // pred_region
      %s44 = ssub.s32 512, 512
      %45 = vsyncadd [#allocation7], %s44
      %s46 = sshll.u32 [#allocation8], 4
      %s47 = int_to_ptr.vmem [resolvable:$true] %s46
      %52 = dma.hbm_to_vmem [thread:$0]  %s2, 512, %s47, [#allocation7], 128, 128, 8
    $region13: #{tpu_custom_call.1} parent=1 // pred_fallthru
      _
    // Predicated region
    $region14: #{tpu_custom_call.1} parent=1 // pred_check
      _
    $region15: #{tpu_custom_call.1} parent=1 // pred_check_branch
      %54 = sbr.rel (0) target = $region17
    $region16: #{tpu_custom_call.1} parent=1 // pred_region
      %s56 = ssub.s32 256, 256
      %57 = vsyncadd [#allocation10], %s56
      %s58 = sshll.u32 [#allocation9], 4
      %s59 = int_to_ptr.vmem [resolvable:$true] %s58
      %64 = dma.hbm_to_vmem [thread:$0]  %s3, 256, %s59, [#allocation10], 128, 128, 8
    $region17: #{tpu_custom_call.1} parent=1 // pred_fallthru
      _
    // Predicated region
    $region18: #{tpu_custom_call.1} parent=1 // pred_check
      _
    $region19: #{tpu_custom_call.1} parent=1 // pred_check_branch
      %66 = sbr.rel (0) target = $region21
    $region20: #{tpu_custom_call.1} parent=1 // pred_region
      %s68 = ssub.s32 16, 16
      %69 = vsyncadd [#allocation10], %s68
      %s71 = sshll.u32 [#allocation11], 4
      %s72 = int_to_ptr.vmem [resolvable:$true] %s71
      %74 = dma.hbm_to_vmem [thread:$0]  %s4, 16, %s72, [#allocation10]
    $region21: #{tpu_custom_call.1} parent=1 // pred_fallthru
      _
    // Predicated region
    $region22: #{tpu_custom_call.1} parent=1 // pred_check
      _
    $region23: #{tpu_custom_call.1} parent=1 // pred_check_branch
      %76 = sbr.rel (0) target = $region25
    $region24: #{tpu_custom_call.1} parent=1 // pred_region
      %s78 = ssub.s32 1024, 1024
      %79 = vsyncadd [#allocation13], %s78
      %s80 = sshll.u32 [#allocation12], 4
      %s81 = int_to_ptr.vmem [resolvable:$true] %s80
      %86 = dma.hbm_to_vmem [thread:$0]  %s5, 1024, %s81, [#allocation13], 128, 128, 8
    $region25: #{tpu_custom_call.1} parent=1 // pred_fallthru
      _
    // Predicated region
    $region26: #{tpu_custom_call.1} parent=1 // pred_check
      _
    $region27: #{tpu_custom_call.1} parent=1 // pred_check_branch
      %88 = sbr.rel (0) target = $region29
    $region28: #{tpu_custom_call.1} parent=1 // pred_region
      %s90 = ssub.s32 16, 16
      %91 = vsyncadd [#allocation13], %s90
      %s93 = sshll.u32 [#allocation14], 4
      %s94 = int_to_ptr.vmem [resolvable:$true] %s93
      %96 = dma.hbm_to_vmem [thread:$0]  %s6, 16, %s94, [#allocation13]
    $region29: #{tpu_custom_call.1} parent=1 // pred_fallthru
      _
    // Predicated region
    $region30: #{tpu_custom_call.1} parent=1 // pred_check
      _
    $region31: #{tpu_custom_call.1} parent=1 // pred_check_branch
      %98 = sbr.rel (0) target = $region33
    $region32: #{tpu_custom_call.1} parent=1 // pred_region
      %99 = dma.done [#allocation4], 128
    $region33: #{tpu_custom_call.1} parent=1 // pred_fallthru
      _
    // Predicated region
    $region34: #{tpu_custom_call.1} parent=1 // pred_check
      _
    $region35: #{tpu_custom_call.1} parent=1 // pred_check_branch
      %101 = sbr.rel (0) target = $region37
    $region36: #{tpu_custom_call.1} parent=1 // pred_region
      %102 = dma.done [#allocation7], 128
    $region37: #{tpu_custom_call.1} parent=1 // pred_fallthru
      _
    // Predicated region
    $region38: #{tpu_custom_call.1} parent=1 // pred_check
      _
    $region39: #{tpu_custom_call.1} parent=1 // pred_check_branch
      %104 = sbr.rel (0) target = $region41
    $region40: #{tpu_custom_call.1} parent=1 // pred_region
      %105 = dma.done [#allocation7], 512
    $region41: #{tpu_custom_call.1} parent=1 // pred_fallthru
      _
    // Predicated region
    $region42: #{tpu_custom_call.1} parent=1 // pred_check
      _
    $region43: #{tpu_custom_call.1} parent=1 // pred_check_branch
      %107 = sbr.rel (0) target = $region45
    $region44: #{tpu_custom_call.1} parent=1 // pred_region
      %108 = dma.done [#allocation10], 256
    $region45: #{tpu_custom_call.1} parent=1 // pred_fallthru
      _
    // Predicated region
    $region46: #{tpu_custom_call.1} parent=1 // pred_check
      _
    $region47: #{tpu_custom_call.1} parent=1 // pred_check_branch
      %110 = sbr.rel (0) target = $region49
    $region48: #{tpu_custom_call.1} parent=1 // pred_region
      %111 = dma.done [#allocation10], 16
    $region49: #{tpu_custom_call.1} parent=1 // pred_fallthru
      _
    // Predicated region
    $region50: #{tpu_custom_call.1} parent=1 // pred_check
      _
    $region51: #{tpu_custom_call.1} parent=1 // pred_check_branch
      %113 = sbr.rel (0) target = $region53
    $region52: #{tpu_custom_call.1} parent=1 // pred_region
      %114 = dma.done [#allocation13], 1024
    $region53: #{tpu_custom_call.1} parent=1 // pred_fallthru
      _
    // Predicated region
    $region54: #{tpu_custom_call.1} parent=1 // pred_check
      _
    $region55: #{tpu_custom_call.1} parent=1 // pred_check_branch
      %116 = sbr.rel (0) target = $region57
    $region56: #{tpu_custom_call.1} parent=1 // pred_region
      %117 = dma.done [#allocation13], 16
    $region57: #{tpu_custom_call.1} parent=1 // pred_fallthru
      _
    %v118 = vld [vmem:[#allocation3] sm:$0xf]
    %v119 = vld [vmem:[#allocation3 + $0x4] sm:$0xf]
    %v120 = vunpack.c.l.bf16 %v118
    %v121 = vunpack.c.l.bf16 %v119
    %v122 = vld [vmem:[#allocation6] sm:$0xf]
    %v123 = vld [vmem:[#allocation6 + $0x4] sm:$0xf]
    %v124 = vunpack.c.l.bf16 %v122
    %v125 = vunpack.c.l.bf16 %v123
    %v126 = vld [vmem:[#allocation8] sm:$0xff]
    %v127 = vld [vmem:[#allocation8 + $0x8] sm:$0xff]
    %v128 = vld [vmem:[#allocation8 + $0x10] sm:$0xff]
    %v129 = vld [vmem:[#allocation8 + $0x18] sm:$0xff]
    %v130 = vld [vmem:[#allocation9] sm:$0xff]
    %v131 = vld [vmem:[#allocation9 + $0x8] sm:$0xff]
    %vm132 = vcmask 130048
    %v134 = vsel %vm132, %v124, 0
    %v137 = vsel %vm132, %v125, 0
    %139 = vmatprep.subr.mxu0 0.0
    %140 = vmatpush1.msra.mxu0 %v130
    %141 = vmatprep.subr.mxu0 0.0
    %142 = vmatpush1.msra.mxu0 %v131
    %143 = vmatprep.subr.mxu0 0.0
    %144 = vmatpush1.msra.mxu0 0.0
    %145 = vmatprep.subr.mxu0 0.0
    %146 = vmatpush1.msra.mxu0 0.0
    %147 = vmatprep.subr.mxu0 0.0
    %148 = vmatpush1.msra.mxu0 0.0
    %149 = vmatprep.subr.mxu0 0.0
    %150 = vmatpush1.msra.mxu0 0.0
    %151 = vmatprep.subr.mxu0 0.0
    %152 = vmatpush1.msra.mxu0 0.0
    %153 = vmatprep.subr.mxu0 0.0
    %154 = vmatpush1.msra.mxu0 0.0
    %155 = vmatprep.subr.mxu0 0.0
    %156 = vmatpush1.msra.mxu0 0.0
    %157 = vmatprep.subr.mxu0 0.0
    %158 = vmatpush1.msra.mxu0 0.0
    %159 = vmatprep.subr.mxu0 0.0
    %160 = vmatpush1.msra.mxu0 0.0
    %161 = vmatprep.subr.mxu0 0.0
    %162 = vmatpush1.msra.mxu0 0.0
    %163 = vmatprep.subr.mxu0 0.0
    %164 = vmatpush1.msra.mxu0 0.0
    %165 = vmatprep.subr.mxu0 0.0
    %166 = vmatpush1.msra.mxu0 0.0
    %167 = vmatprep.subr.mxu0 0.0
    %168 = vmatpush1.msra.mxu0 0.0
    %169 = vmatprep.subr.mxu0 0.0
    %170 = vmatpush1.msra.mxu0 0.0
    %171 = vmatprep.subr.mxu0 0.0
    %172 = vmatpush1.msra.mxu0 0.0
    %173 = vmatprep.subr.mxu0 0.0
    %174 = vmatpush1.msra.mxu0 0.0
    %175 = vmatprep.subr.mxu0 0.0
    %176 = vmatpush1.msra.mxu0 0.0
    %177 = vmatprep.subr.mxu0 0.0
    %178 = vmatpush1.msra.mxu0 0.0
    %179 = vmatprep.subr.mxu0 0.0
    %180 = vmatpush1.msra.mxu0 0.0
    %181 = vmatprep.subr.mxu0 0.0
    %182 = vmatpush1.msra.mxu0 0.0
    %183 = vmatprep.subr.mxu0 0.0
    %184 = vmatpush1.msra.mxu0 0.0
    %185 = vmatprep.subr.mxu0 0.0
    %186 = vmatpush1.msra.mxu0 0.0
    %187 = vmatprep.subr.mxu0 0.0
    %188 = vmatpush1.msra.mxu0 0.0
    %189 = vmatprep.subr.mxu0 0.0
    %190 = vmatpush1.msra.mxu0 0.0
    %191 = vmatprep.subr.mxu0 0.0
    %192 = vmatpush1.msra.mxu0 0.0
    %193 = vmatprep.subr.mxu0 0.0
    %194 = vmatpush1.msra.mxu0 0.0
    %195 = vmatprep.subr.mxu0 0.0
    %196 = vmatpush1.msra.mxu0 0.0
    %197 = vmatprep.subr.mxu0 0.0
    %198 = vmatpush1.msra.mxu0 0.0
    %199 = vmatprep.subr.mxu0 0.0
    %200 = vmatpush1.msra.mxu0 0.0
    %201 = vmatprep.subr.mxu0 0.0
    %202 = vmatpush1.msra.mxu0 0.0
    %203 = vmatprep.mubr.f32.mxu0 0.0
    %204 = vmatmul.mubr.f32.gmra.mrb[0].mxu0 %v134
    %v205 = vpop.f32.mrb[0].mxu0
    %v206 = vadd.f32 0.0, %v205
    %v207 = vpop.f32.mrb[0].mxu0
    %208 = vmatprep.mubr.f32.mxu0 0.0
    %209 = vmatmul.mubr.f32.gmra.mrb[0].mxu0 %v137
    %v210 = vpop.f32.mrb[0].mxu0
    %v211 = vadd.f32 0.0, %v210
    %v212 = vpop.f32.mrb[0].mxu0
    %213 = vdwg.mxu0
    %vm214 = vcmask 261120
    %v216 = vsel %vm214, %v120, 0
    %v219 = vsel %vm214, %v121, 0
    %221 = vmatprep.subr.mxu0 0.0
    %222 = vmatpush1.msra.mxu0 %v126
    %223 = vmatprep.subr.mxu0 0.0
    %224 = vmatpush1.msra.mxu0 %v127
    %225 = vmatprep.subr.mxu0 0.0
    %226 = vmatpush1.msra.mxu0 %v128
    %227 = vmatprep.subr.mxu0 0.0
    %228 = vmatpush1.msra.mxu0 %v129
    %229 = vmatprep.subr.mxu0 0.0
    %230 = vmatpush1.msra.mxu0 0.0
    %231 = vmatprep.subr.mxu0 0.0
    %232 = vmatpush1.msra.mxu0 0.0
    %233 = vmatprep.subr.mxu0 0.0
    %234 = vmatpush1.msra.mxu0 0.0
    %235 = vmatprep.subr.mxu0 0.0
    %236 = vmatpush1.msra.mxu0 0.0
    %237 = vmatprep.subr.mxu0 0.0
    %238 = vmatpush1.msra.mxu0 0.0
    %239 = vmatprep.subr.mxu0 0.0
    %240 = vmatpush1.msra.mxu0 0.0
    %241 = vmatprep.subr.mxu0 0.0
    %242 = vmatpush1.msra.mxu0 0.0
    %243 = vmatprep.subr.mxu0 0.0
    %244 = vmatpush1.msra.mxu0 0.0
    %245 = vmatprep.subr.mxu0 0.0
    %246 = vmatpush1.msra.mxu0 0.0
    %247 = vmatprep.subr.mxu0 0.0
    %248 = vmatpush1.msra.mxu0 0.0
    %249 = vmatprep.subr.mxu0 0.0
    %250 = vmatpush1.msra.mxu0 0.0
    %251 = vmatprep.subr.mxu0 0.0
    %252 = vmatpush1.msra.mxu0 0.0
    %253 = vmatprep.subr.mxu0 0.0
    %254 = vmatpush1.msra.mxu0 0.0
    %255 = vmatprep.subr.mxu0 0.0
    %256 = vmatpush1.msra.mxu0 0.0
    %257 = vmatprep.subr.mxu0 0.0
    %258 = vmatpush1.msra.mxu0 0.0
    %259 = vmatprep.subr.mxu0 0.0
    %260 = vmatpush1.msra.mxu0 0.0
    %261 = vmatprep.subr.mxu0 0.0
    %262 = vmatpush1.msra.mxu0 0.0
    %263 = vmatprep.subr.mxu0 0.0
    %264 = vmatpush1.msra.mxu0 0.0
    %265 = vmatprep.subr.mxu0 0.0
    %266 = vmatpush1.msra.mxu0 0.0
    %267 = vmatprep.subr.mxu0 0.0
    %268 = vmatpush1.msra.mxu0 0.0
    %269 = vmatprep.subr.mxu0 0.0
    %270 = vmatpush1.msra.mxu0 0.0
    %271 = vmatprep.subr.mxu0 0.0
    %272 = vmatpush1.msra.mxu0 0.0
    %273 = vmatprep.subr.mxu0 0.0
    %274 = vmatpush1.msra.mxu0 0.0
    %275 = vmatprep.subr.mxu0 0.0
    %276 = vmatpush1.msra.mxu0 0.0
    %277 = vmatprep.subr.mxu0 0.0
    %278 = vmatpush1.msra.mxu0 0.0
    %279 = vmatprep.subr.mxu0 0.0
    %280 = vmatpush1.msra.mxu0 0.0
    %281 = vmatprep.subr.mxu0 0.0
    %282 = vmatpush1.msra.mxu0 0.0
    %283 = vmatprep.subr.mxu0 0.0
    %284 = vmatpush1.msra.mxu0 0.0
    %285 = vmatprep.mubr.f32.mxu0 0.0
    %286 = vmatmul.mubr.f32.gmra.mrb[0].mxu0 %v216
    %v287 = vpop.f32.mrb[0].mxu0
    %v288 = vadd.f32 %v206, %v287
    %v289 = vpop.f32.mrb[0].mxu0
    %290 = vmatprep.mubr.f32.mxu0 0.0
    %291 = vmatmul.mubr.f32.gmra.mrb[0].mxu0 %v219
    %v292 = vpop.f32.mrb[0].mxu0
    %v293 = vadd.f32 %v211, %v292
    %v294 = vpop.f32.mrb[0].mxu0
    %295 = vdwg.mxu0
    %v296 = vld [vmem:[#allocation11] sm:$0x1]
    %v298 = vlaneseq
    %v299 = vshrl.u32 %v298, 7
    %v300 = vsub.s32 0, %v299
    %v301 = vrot.slane %v296, %v300
    %v303 = vadd.f32 %v288, %v301
    %v304 = vadd.f32 %v293, %v301
    %v305 = vmax.f32 %v303, 0.0
    %v306 = vmax.f32 %v304, 0.0
    %v307 = vld [vmem:[#allocation12] sm:$0xff]
    %v308 = vld [vmem:[#allocation12 + $0x8] sm:$0xff]
    %v309 = vld [vmem:[#allocation12 + $0x10] sm:$0xff]
    %v310 = vld [vmem:[#allocation12 + $0x18] sm:$0xff]
    %v311 = vld [vmem:[#allocation12 + $0x20] sm:$0xff]
    %v312 = vld [vmem:[#allocation12 + $0x28] sm:$0xff]
    %v313 = vld [vmem:[#allocation12 + $0x30] sm:$0xff]
    %v314 = vld [vmem:[#allocation12 + $0x38] sm:$0xff]
    %v315 = vld [vmem:[#allocation14] sm:$0x1]
    %v317 = vlaneseq
    %v318 = vshrl.u32 %v317, 7
    %v319 = vsub.s32 0, %v318
    %v320 = vrot.slane %v315, %v319
    %vm322 = vcmask 523264
    %v324 = vsel %vm322, %v305, 0
    %v327 = vsel %vm322, %v306, 0
    %329 = vmatprep.subr.mxu0 0.0
    %330 = vmatpush1.msra.mxu0 %v307
    %331 = vmatprep.subr.mxu0 0.0
    %332 = vmatpush1.msra.mxu0 %v308
    %333 = vmatprep.subr.mxu0 0.0
    %334 = vmatpush1.msra.mxu0 %v309
    %335 = vmatprep.subr.mxu0 0.0
    %336 = vmatpush1.msra.mxu0 %v310
    %337 = vmatprep.subr.mxu0 0.0
    %338 = vmatpush1.msra.mxu0 %v311
    %339 = vmatprep.subr.mxu0 0.0
    %340 = vmatpush1.msra.mxu0 %v312
    %341 = vmatprep.subr.mxu0 0.0
    %342 = vmatpush1.msra.mxu0 %v313
    %343 = vmatprep.subr.mxu0 0.0
    %344 = vmatpush1.msra.mxu0 %v314
    %345 = vmatprep.subr.mxu0 0.0
    %346 = vmatpush1.msra.mxu0 0.0
    %347 = vmatprep.subr.mxu0 0.0
    %348 = vmatpush1.msra.mxu0 0.0
    %349 = vmatprep.subr.mxu0 0.0
    %350 = vmatpush1.msra.mxu0 0.0
    %351 = vmatprep.subr.mxu0 0.0
    %352 = vmatpush1.msra.mxu0 0.0
    %353 = vmatprep.subr.mxu0 0.0
    %354 = vmatpush1.msra.mxu0 0.0
    %355 = vmatprep.subr.mxu0 0.0
    %356 = vmatpush1.msra.mxu0 0.0
    %357 = vmatprep.subr.mxu0 0.0
    %358 = vmatpush1.msra.mxu0 0.0
    %359 = vmatprep.subr.mxu0 0.0
    %360 = vmatpush1.msra.mxu0 0.0
    %361 = vmatprep.subr.mxu0 0.0
    %362 = vmatpush1.msra.mxu0 0.0
    %363 = vmatprep.subr.mxu0 0.0
    %364 = vmatpush1.msra.mxu0 0.0
    %365 = vmatprep.subr.mxu0 0.0
    %366 = vmatpush1.msra.mxu0 0.0
    %367 = vmatprep.subr.mxu0 0.0
    %368 = vmatpush1.msra.mxu0 0.0
    %369 = vmatprep.subr.mxu0 0.0
    %370 = vmatpush1.msra.mxu0 0.0
    %371 = vmatprep.subr.mxu0 0.0
    %372 = vmatpush1.msra.mxu0 0.0
    %373 = vmatprep.subr.mxu0 0.0
    %374 = vmatpush1.msra.mxu0 0.0
    %375 = vmatprep.subr.mxu0 0.0
    %376 = vmatpush1.msra.mxu0 0.0
    %377 = vmatprep.subr.mxu0 0.0
    %378 = vmatpush1.msra.mxu0 0.0
    %379 = vmatprep.subr.mxu0 0.0
    %380 = vmatpush1.msra.mxu0 0.0
    %381 = vmatprep.subr.mxu0 0.0
    %382 = vmatpush1.msra.mxu0 0.0
    %383 = vmatprep.subr.mxu0 0.0
    %384 = vmatpush1.msra.mxu0 0.0
    %385 = vmatprep.subr.mxu0 0.0
    %386 = vmatpush1.msra.mxu0 0.0
    %387 = vmatprep.subr.mxu0 0.0
    %388 = vmatpush1.msra.mxu0 0.0
    %389 = vmatprep.subr.mxu0 0.0
    %390 = vmatpush1.msra.mxu0 0.0
    %391 = vmatprep.subr.mxu0 0.0
    %392 = vmatpush1.msra.mxu0 0.0
    %393 = vmatprep.mubr.f32.mxu0 0.0
    %394 = vmatmul.mubr.f32.gmra.mrb[0].mxu0 %v324
    %v395 = vpop.f32.mrb[0].mxu0
    %v396 = vadd.f32 %v320, %v395
    %v397 = vpop.f32.mrb[0].mxu0
    %398 = vmatprep.mubr.f32.mxu0 0.0
    %399 = vmatmul.mubr.f32.gmra.mrb[0].mxu0 %v327
    %v400 = vpop.f32.mrb[0].mxu0
    %v401 = vadd.f32 %v320, %v400
    %v402 = vpop.f32.mrb[0].mxu0
    %403 = vdwg.mxu0
    %v404 = vadd.f32 %v396, %v120
    %v405 = vadd.f32 %v401, %v121
    %v406 = vsel %vm214, %v404, 0.0
    %407 = vadd.xlane.f32.xlu0 %v406
    %v408 = vpop.xlane.xlu0 %407
    %v409 = vsel %vm214, %v405, 0.0
    %410 = vadd.xlane.f32.xlu0 %v409
    %v411 = vpop.xlane.xlu0 %410
    %v412 = vrcp.pop 32.0
    %v413 = vmul.f32 %v408, %v412
    %v414 = vmul.f32 %v411, %v412
    %v415 = vsub.f32 %v404, %v413
    %v416 = vsub.f32 %v405, %v414
    %v417 = vmul.f32 %v415, %v415
    %v418 = vmul.f32 %v416, %v416
    %v419 = vsel %vm214, %v417, 0.0
    %420 = vadd.xlane.f32.xlu0 %v419
    %v421 = vpop.xlane.xlu0 %420
    %v422 = vsel %vm214, %v418, 0.0
    %423 = vadd.xlane.f32.xlu0 %v422
    %v424 = vpop.xlane.xlu0 %423
    %v425 = vmul.f32 %v421, %v412
    %v426 = vmul.f32 %v424, %v412
    %v427 = vadd.f32 %v425, 1e-05
    %v428 = vadd.f32 %v426, 1e-05
    %v429 = vrsqrt.pop %v427
    %v430 = vrsqrt.pop %v428
    %v431 = vmul.f32 %v415, %v429
    %v432 = vmul.f32 %v416, %v430
    %433 = vst.msk [vmem:[#allocation2] sm:$0xff] %vm214, %v431
    %434 = vst.msk [vmem:[#allocation2 + $0x8] sm:$0xff] %vm214, %v432
    %v435 = vld [vmem:[#allocation2] ss:$4 sm:$0xf]
    %v436 = vpack.c.bf16 %v435, %v435
    %vm437 = vcmask 254976
    %438 = vst.msk [vmem:[#allocation15] sm:$0x3] %vm437, %v436
    %s439 = scalar_lea.vmem [#allocation2], 1
    %v440 = vld [vmem:[%s439] ss:$4 sm:$0xf]
    %v441 = vpack.c.bf16 %v440, %v440
    %v444 = vunpack.c.l.s4 1983009808
    %v445 = vunpack.c.0.s8 %v444
    %v446 = vlaneseq
    %v447 = vshrl.u32 %v446, 7
    %v448 = vsub.s32 %v445, %v447
    %v449 = vrot.slane %v441, %v448
    %450 = vrot.lane.b32.xlu0 %v449, 32
    %v451 = vpop.permute.xlu0 %450
    %vm453 = vcmask 517376
    %454 = vst.msk [vmem:[#allocation15] sm:$0x3] %vm453, %v451
    %s455 = scalar_lea.vmem [#allocation2], 2
    %v456 = vld [vmem:[%s455] ss:$4 sm:$0xf]
    %v457 = vpack.c.bf16 %v456, %v456
    %v460 = vunpack.c.l.s4 1983009808
    %v461 = vunpack.c.0.s8 %v460
    %v462 = vlaneseq
    %v463 = vshrl.u32 %v462, 7
    %v464 = vsub.s32 %v461, %v463
    %v465 = vrot.slane %v457, %v464
    %466 = vrot.lane.b32.xlu0 %v465, 64
    %v467 = vpop.permute.xlu0 %466
    %vm469 = vcmask 779776
    %470 = vst.msk [vmem:[#allocation15] sm:$0x3] %vm469, %v467
    %s471 = scalar_lea.vmem [#allocation2], 3
    %v472 = vld [vmem:[%s471] ss:$4 sm:$0xf]
    %v473 = vpack.c.bf16 %v472, %v472
    %v476 = vunpack.c.l.s4 1983009808
    %v477 = vunpack.c.0.s8 %v476
    %v478 = vlaneseq
    %v479 = vshrl.u32 %v478, 7
    %v480 = vsub.s32 %v477, %v479
    %v481 = vrot.slane %v473, %v480
    %482 = vrot.lane.b32.xlu0 %v481, 96
    %v483 = vpop.permute.xlu0 %482
    %vm485 = vcmask 1042176
    %486 = vst.msk [vmem:[#allocation15] sm:$0x3] %vm485, %v483
    // Predicated region
    $region58: #{tpu_custom_call.1} parent=1 // pred_check
      _
    $region59: #{tpu_custom_call.1} parent=1 // pred_check_branch
      %488 = sbr.rel (0) target = $region61
    $region60: #{tpu_custom_call.1} parent=1 // pred_region
      %s490 = ssub.s32 32, 32
      %491 = vsyncadd [#allocation5], %s490
      %s493 = sshll.u32 [#allocation15], 4
      %s494 = int_to_ptr.vmem [resolvable:$true] %s493
      %496 = dma.vmem_to_hbm [thread:$0]  %s494, 32, %s7, [#allocation5]
    $region61: #{tpu_custom_call.1} parent=1 // pred_fallthru
      _
    // Predicated region
    $region62: #{tpu_custom_call.1} parent=1 // pred_check
      _
    $region63: #{tpu_custom_call.1} parent=1 // pred_check_branch
      %498 = sbr.rel (0) target = $region65
    $region64: #{tpu_custom_call.1} parent=1 // pred_region
      %499 = dma.done [#allocation5], 32
    $region65: #{tpu_custom_call.1} parent=1 // pred_fallthru
      _
    %500 = vsyncpa [#allocation4], 1
    %501 = vsyncpa [#allocation7], 1
    %502 = vsyncpa [#allocation10], 1
    %503 = vsyncpa [#allocation13], 1
    %504 = vsyncpa [#allocation5], 1

</llo_original>
